<compile_context>
chip_gen: v5e
topology: v5e:2x2
jax: 0.10.0
libtpu: 0.0.40
codegen_flags: <defaults>
</compile_context>

<pallas_src>
import functools

import jax
import jax.numpy as jnp
from jax.experimental import pallas as pl
from jax.experimental.pallas import tpu as pltpu


def predict_fused_kernel(x_ref, w_ref, b_ref, lw_ref, hsel_ref, bsel_ref, lb_ref, o_ref):
    """All P prediction heads fused in a single invocation.

    x_ref    : (B*L, Cin)     channels-last rows (l fastest within each batch element)
    w_ref    : (Cin, P*Cout)  conv1x1 weights (BatchNorm folded), all heads stacked
    b_ref    : (1,   P*Cout)  folded conv+BN bias
    lw_ref   : (B*L, P*Cout)  Linear weights re-ordered to the (b,l)-row x (p,c)-col layout
    hsel_ref : (P*Cout, P)    block indicator: sums channels within each head
    bsel_ref : (B, B*L)       block indicator: sums positions within each batch element
    lb_ref   : (1, P)         Linear biases
    o_ref    : (B, P)         stacked head outputs (head p == column p)
    """
    # 1x1 conv (+ folded BatchNorm) for all heads at once: one MXU matmul.
    y = jnp.dot(x_ref[...], w_ref[...], preferred_element_type=jnp.float32)
    y = y + b_ref[...]                                              # (B*L, P*Cout)

    # Exact (erf) GELU, matching nn.GELU() default.
    inv_sqrt2 = jnp.float32(0.7071067811865476)
    y = 0.5 * y * (1.0 + jax.lax.erf(y * inv_sqrt2))

    # Linear(Cout*L -> 1) per head (Dropout == identity at inference):
    # elementwise weight, then two tiny block-indicator matmuls. No in-kernel
    # reshapes, no XLU reductions; the final store is a single (B, P) slab.
    t = y * lw_ref[...]                                                        # (B*L, P*Cout)
    per_row = jnp.dot(t, hsel_ref[...], preferred_element_type=jnp.float32)    # (B*L, P)
    out = jnp.dot(bsel_ref[...], per_row, preferred_element_type=jnp.float32)  # (B, P)
    o_ref[...] = out + lb_ref[...]


@functools.partial(jax.jit, static_argnames=("eps",))
def predict_forward(x_ncl, conv_w, conv_b, bn_gamma, bn_beta, bn_mean, bn_var,
                    lin_w, lin_b, eps=1e-5):
    """x_ncl: (B, Cin, L). Returns stacked predictions of shape (B, P);
    head p's output (PyTorch list entry p) is out[:, p:p+1]."""
    P, Cout, Cin = conv_w.shape
    B, _, L = x_ncl.shape
    f32 = jnp.float32

    # Fold eval-mode BatchNorm into the 1x1 conv; stack every head along out-channels.
    scale = bn_gamma / jnp.sqrt(bn_var + eps)                      # (P, Cout)
    w_fold = conv_w * scale[:, :, None]                            # (P, Cout, Cin)
    b_fold = (conv_b - bn_mean) * scale + bn_beta                  # (P, Cout)
    w_all = jnp.transpose(w_fold, (2, 0, 1)).reshape(Cin, P * Cout).astype(f32)
    b_all = b_fold.reshape(1, P * Cout).astype(f32)

    # nn.Linear weight is (1, Cout*L) with flatten order (c, l) from the NCL conv output.
    # Re-order it to the kernel's (b,l)-row x (p,c)-col layout and tile over the batch.
    lw = jnp.transpose(lin_w.reshape(P, Cout, L), (2, 0, 1)).reshape(L, P * Cout)
    lw_rows = jnp.tile(lw, (B, 1)).astype(f32)                     # (B*L, P*Cout)
    lb_row = lin_b.reshape(1, P).astype(f32)                       # (1, P)

    # Block-indicator matrices so both reductions run on the MXU (no XLU reduce passes).
    head_sel = jnp.repeat(jnp.eye(P, dtype=f32), Cout, axis=0)     # (P*Cout, P)
    batch_sel = jnp.repeat(jnp.eye(B, dtype=f32), L, axis=1)       # (B, B*L)

    # Channels-last flatten done in the wrapper (free for XLA): kernel is pure compute.
    x_rows = jnp.transpose(x_ncl, (0, 2, 1)).reshape(B * L, Cin).astype(f32)

    vmem_spec = pl.BlockSpec(memory_space=pltpu.MemorySpace.VMEM)
    out = pl.pallas_call(
        predict_fused_kernel,
        out_shape=jax.ShapeDtypeStruct((B, P), f32),
        in_specs=[vmem_spec] * 7,
        out_specs=vmem_spec,
    )(x_rows, w_all, b_all, lw_rows, head_sel, batch_sel, lb_row)
    return out


def predict_forward_list(*args, **kwargs):
    """Matches the PyTorch module's return type: list of P arrays of shape (B, 1)."""
    out = predict_forward(*args, **kwargs)                         # (B, P)
    return [out[:, p:p + 1] for p in range(out.shape[1])]


def reference_forward(x, conv_w, conv_b, gamma, beta, mean, var, lin_w, lin_b, eps=1e-5):
    """Pure-JAX reference mirroring the PyTorch module (eval mode)."""
    outs = []
    for p in range(conv_w.shape[0]):
        y = jnp.einsum('oc,bcl->bol', conv_w[p], x) + conv_b[p][None, :, None]
        y = (y - mean[p][None, :, None]) / jnp.sqrt(var[p][None, :, None] + eps)
        y = y * gamma[p][None, :, None] + beta[p][None, :, None]
        y = 0.5 * y * (1.0 + jax.lax.erf(y * jnp.float32(0.7071067811865476)))
        yf = y.reshape(y.shape[0], -1)                             # flatten(1): (c, l) order
        outs.append(yf @ lin_w[p].T + lin_b[p])
    return outs


if __name__ == "__main__":
    # Module hyperparameters (small, consistent with forward()):
    min_size = 16          # L (sequence length)
    projection_dim = 32    # Cin
    final_dim = 16         # Cout
    num_predictions = 3    # P
    # drop_rate is irrelevant at inference (Dropout == identity)
    B = 2

    key = jax.random.PRNGKey(0)
    ks = jax.random.split(key, 8)

    x = jax.random.normal(ks[0], (B, projection_dim, min_size), jnp.float32)

    conv_w = 0.1 * jax.random.normal(ks[1], (num_predictions, final_dim, projection_dim), jnp.float32)
    conv_b = 0.1 * jax.random.normal(ks[2], (num_predictions, final_dim), jnp.float32)
    bn_gamma = 1.0 + 0.1 * jax.random.normal(ks[3], (num_predictions, final_dim), jnp.float32)
    bn_beta = 0.1 * jax.random.normal(ks[4], (num_predictions, final_dim), jnp.float32)
    bn_mean = 0.1 * jax.random.normal(ks[5], (num_predictions, final_dim), jnp.float32)
    bn_var = jnp.abs(1.0 + 0.1 * jax.random.normal(ks[6], (num_predictions, final_dim), jnp.float32))
    lin_w = 0.1 * jax.random.normal(ks[7], (num_predictions, 1, final_dim * min_size), jnp.float32)
    lin_b = 0.05 * jnp.arange(num_predictions, dtype=jnp.float32).reshape(num_predictions, 1)

    out = predict_forward(x, conv_w, conv_b, bn_gamma, bn_beta, bn_mean, bn_var, lin_w, lin_b)
    out = jax.block_until_ready(out)
    assert out.shape == (B, num_predictions)

    refs = reference_forward(x, conv_w, conv_b, bn_gamma, bn_beta, bn_mean, bn_var, lin_w, lin_b)
    for p in range(num_predictions):
        o = out[:, p:p + 1]
        r = refs[p]
        assert o.shape == (B, 1)
        assert jnp.allclose(o, r, atol=2e-3, rtol=2e-3), (p, o, r)

    # List-of-(B,1) API matching the PyTorch module's return type also works.
    outs_list = predict_forward_list(x, conv_w, conv_b, bn_gamma, bn_beta, bn_mean, bn_var, lin_w, lin_b)
    for o, r in zip(outs_list, refs):
        assert jnp.allclose(o, r, atol=2e-3, rtol=2e-3)

    print("KERNEL_OK")
</pallas_src>

<mosaic_0001>
module attributes {stable_mosaic.version = 11 : i64} {
  func.func @predict_fused_kernel(%arg0: memref<32x32xf32, #tpu.memory_space<vmem>>, %arg1: memref<32x48xf32, #tpu.memory_space<vmem>>, %arg2: memref<1x48xf32, #tpu.memory_space<vmem>>, %arg3: memref<32x48xf32, #tpu.memory_space<vmem>>, %arg4: memref<48x3xf32, #tpu.memory_space<vmem>>, %arg5: memref<2x32xf32, #tpu.memory_space<vmem>>, %arg6: memref<1x3xf32, #tpu.memory_space<vmem>>, %arg7: memref<2x3xf32, #tpu.memory_space<vmem>>) attributes {dimension_semantics = [], scalar_prefetch = 0 : i64, scratch_operands = 0 : i64, tpu.core_type = #tpu.core_type<tc>} {
    %c0 = arith.constant 0 : index
    %c0_0 = arith.constant 0 : index
    %0 = vector.load %arg0[%c0, %c0_0] : memref<32x32xf32, #tpu.memory_space<vmem>>, vector<32x32xf32>
    %c0_1 = arith.constant 0 : index
    %c0_2 = arith.constant 0 : index
    %1 = vector.load %arg1[%c0_1, %c0_2] : memref<32x48xf32, #tpu.memory_space<vmem>>, vector<32x48xf32>
    %cst = arith.constant dense<0.000000e+00> : vector<32x48xf32>
    %2 = tpu.matmul %0, %1, %cst {dimension_numbers = #tpu.dot_dimension_numbers<[1], [0], [0], [1], [0, 0, 1, 1], [], []>} : vector<32x32xf32>, vector<32x48xf32>, vector<32x48xf32> -> vector<32x48xf32>
    %c0_3 = arith.constant 0 : index
    %c0_4 = arith.constant 0 : index
    %3 = vector.load %arg2[%c0_3, %c0_4] : memref<1x48xf32, #tpu.memory_space<vmem>>, vector<1x48xf32>
    %4 = vector.broadcast %3 : vector<1x48xf32> to vector<32x48xf32>
    %5 = arith.addf %2, %4 : vector<32x48xf32>
    %cst_5 = arith.constant 5.000000e-01 : f32
    %6 = vector.broadcast %cst_5 : f32 to vector<32x48xf32>
    %7 = arith.mulf %6, %5 : vector<32x48xf32>
    %cst_6 = arith.constant 0.707106769 : f32
    %8 = vector.broadcast %cst_6 : f32 to vector<32x48xf32>
    %9 = arith.mulf %5, %8 : vector<32x48xf32>
    %10 = math.erf %9 : vector<32x48xf32>
    %cst_7 = arith.constant 1.000000e+00 : f32
    %11 = vector.broadcast %cst_7 : f32 to vector<32x48xf32>
    %12 = arith.addf %11, %10 : vector<32x48xf32>
    %13 = arith.mulf %7, %12 : vector<32x48xf32>
    %c0_8 = arith.constant 0 : index
    %c0_9 = arith.constant 0 : index
    %14 = vector.load %arg3[%c0_8, %c0_9] : memref<32x48xf32, #tpu.memory_space<vmem>>, vector<32x48xf32>
    %15 = arith.mulf %13, %14 : vector<32x48xf32>
    %c0_10 = arith.constant 0 : index
    %c0_11 = arith.constant 0 : index
    %16 = vector.load %arg4[%c0_10, %c0_11] : memref<48x3xf32, #tpu.memory_space<vmem>>, vector<48x3xf32>
    %cst_12 = arith.constant dense<0.000000e+00> : vector<32x3xf32>
    %17 = tpu.matmul %15, %16, %cst_12 {dimension_numbers = #tpu.dot_dimension_numbers<[1], [0], [0], [1], [0, 0, 1, 1], [], []>} : vector<32x48xf32>, vector<48x3xf32>, vector<32x3xf32> -> vector<32x3xf32>
    %c0_13 = arith.constant 0 : index
    %c0_14 = arith.constant 0 : index
    %18 = vector.load %arg5[%c0_13, %c0_14] : memref<2x32xf32, #tpu.memory_space<vmem>>, vector<2x32xf32>
    %cst_15 = arith.constant dense<0.000000e+00> : vector<2x3xf32>
    %19 = tpu.matmul %18, %17, %cst_15 {dimension_numbers = #tpu.dot_dimension_numbers<[1], [0], [0], [1], [0, 0, 1, 1], [], []>} : vector<2x32xf32>, vector<32x3xf32>, vector<2x3xf32> -> vector<2x3xf32>
    %c0_16 = arith.constant 0 : index
    %c0_17 = arith.constant 0 : index
    %20 = vector.load %arg6[%c0_16, %c0_17] : memref<1x3xf32, #tpu.memory_space<vmem>>, vector<1x3xf32>
    %21 = vector.broadcast %20 : vector<1x3xf32> to vector<2x3xf32>
    %22 = arith.addf %19, %21 : vector<2x3xf32>
    %c0_18 = arith.constant 0 : index
    %c0_19 = arith.constant 0 : index
    %23 = vector.load %arg7[%c0_18, %c0_19] : memref<2x3xf32, #tpu.memory_space<vmem>>, vector<2x3xf32>
    tpu.vector_store %arg7[%c0_18, %c0_19], %22 {strides = array<i32>} : memref<2x3xf32, #tpu.memory_space<vmem>>, vector<2x3xf32>,
    return
  }
}

</mosaic_0001>

<llo_original>
// kernel: predict_forward.1
$region0: #{predict_forward.1}
  #allocation0 [shape = 'u32[]', space=smem, size = 0x4, offset = 0x4, fixed_abs, tag = 'smem constant byte address 0x4 - core index']
  #allocation1 [shape = 'u32[72,128]{1,0:T(1,128)}', space=vmem, size = 0x9000, scoped, tag = 'internal scratch']
  %s0 = inlined_call_operand.vmem [shape: f32[32,32], index: 0, kind: input, shape index: {}]
  %s1 = inlined_call_operand.vmem [shape: f32[32,48], index: 1, kind: input, shape index: {}]
  %s2 = inlined_call_operand.vmem [shape: f32[1,48], index: 2, kind: input, shape index: {}]
  %s3 = inlined_call_operand.vmem [shape: f32[32,48], index: 3, kind: input, shape index: {}]
  %s4 = inlined_call_operand.vmem [shape: f32[48,3], index: 4, kind: input, shape index: {}]
  %s5 = inlined_call_operand.vmem [shape: f32[2,32], index: 5, kind: input, shape index: {}]
  %s6 = inlined_call_operand.vmem [shape: f32[1,3], index: 6, kind: input, shape index: {}]
  %s7 = inlined_call_operand.hbm [shape: f32[2,3], index: 7, kind: output, shape index: {}]
  %s8 = sld [smem:[#allocation0]]
  $region38: #{predict_forward.1} parent=0
    _
  %s10 = ssub.s32 1, %s8
  %s11 = scalar_select 0, %s10, %s8
  $region1: #{predict_forward.1} parent=0
    #allocation2 [shape = 'u8[1024]{0}', space=vmem, size = 0x400, scoped, tag = 'output window, operand 0, single buffered']
    #allocation3 [shape = 's32[1]{0}', space=sflag, size = 0x4, scoped, tag = 'scoped memory for predict_forward.1']
    %12 = vsyncpa [#allocation3], 0
    // Predicated region
    $region2: #{predict_forward.1} parent=1 // pred_check
      _
    $region3: #{predict_forward.1} parent=1 // pred_check_branch
      %14 = sbr.rel (0) target = $region5
    $region4: #{predict_forward.1} parent=1 // pred_region
      _
    $region5: #{predict_forward.1} parent=1 // pred_fallthru
      _
    // Predicated region
    $region6: #{predict_forward.1} parent=1 // pred_check
      _
    $region7: #{predict_forward.1} parent=1 // pred_check_branch
      %16 = sbr.rel (0) target = $region9
    $region8: #{predict_forward.1} parent=1 // pred_region
      _
    $region9: #{predict_forward.1} parent=1 // pred_fallthru
      _
    // Predicated region
    $region10: #{predict_forward.1} parent=1 // pred_check
      _
    $region11: #{predict_forward.1} parent=1 // pred_check_branch
      %18 = sbr.rel (0) target = $region13
    $region12: #{predict_forward.1} parent=1 // pred_region
      _
    $region13: #{predict_forward.1} parent=1 // pred_fallthru
      _
    // Predicated region
    $region14: #{predict_forward.1} parent=1 // pred_check
      _
    $region15: #{predict_forward.1} parent=1 // pred_check_branch
      %20 = sbr.rel (0) target = $region17
    $region16: #{predict_forward.1} parent=1 // pred_region
      _
    $region17: #{predict_forward.1} parent=1 // pred_fallthru
      _
    // Predicated region
    $region18: #{predict_forward.1} parent=1 // pred_check
      _
    $region19: #{predict_forward.1} parent=1 // pred_check_branch
      %22 = sbr.rel (0) target = $region21
    $region20: #{predict_forward.1} parent=1 // pred_region
      _
    $region21: #{predict_forward.1} parent=1 // pred_fallthru
      _
    // Predicated region
    $region22: #{predict_forward.1} parent=1 // pred_check
      _
    $region23: #{predict_forward.1} parent=1 // pred_check_branch
      %24 = sbr.rel (0) target = $region25
    $region24: #{predict_forward.1} parent=1 // pred_region
      _
    $region25: #{predict_forward.1} parent=1 // pred_fallthru
      _
    // Predicated region
    $region26: #{predict_forward.1} parent=1 // pred_check
      _
    $region27: #{predict_forward.1} parent=1 // pred_check_branch
      %26 = sbr.rel (0) target = $region29
    $region28: #{predict_forward.1} parent=1 // pred_region
      _
    $region29: #{predict_forward.1} parent=1 // pred_fallthru
      _
    %v27 = vld [vmem:[%s0] sm:$0xff]
    %v28 = vld [vmem:[%s0 + $0x8] sm:$0xff]
    %v29 = vld [vmem:[%s0 + $0x10] sm:$0xff]
    %v30 = vld [vmem:[%s0 + $0x18] sm:$0xff]
    %v31 = vld [vmem:[%s1] sm:$0xff]
    %v32 = vld [vmem:[%s1 + $0x8] sm:$0xff]
    %v33 = vld [vmem:[%s1 + $0x10] sm:$0xff]
    %v34 = vld [vmem:[%s1 + $0x18] sm:$0xff]
    %v35 = vld [vmem:[%s2] sm:$0x1]
    %v37 = vperm.slane %v35, 0
    %vm39 = vcmask 261120
    %v41 = vsel %vm39, %v27, 0
    %v44 = vsel %vm39, %v28, 0
    %v47 = vsel %vm39, %v29, 0
    %v50 = vsel %vm39, %v30, 0
    %52 = vmatpush.msra.mxu0 0.0
    %53 = vmatpush.msra.mxu0 0.0
    %54 = vmatpush.msra.mxu0 0.0
    %55 = vmatpush.msra.mxu0 0.0
    %56 = vmatpush.msra.mxu0 0.0
    %57 = vmatpush.msra.mxu0 0.0
    %58 = vmatpush.msra.mxu0 0.0
    %59 = vmatpush.msra.mxu0 0.0
    %60 = vmatpush.msra.mxu0 0.0
    %61 = vmatpush.msra.mxu0 0.0
    %62 = vmatpush.msra.mxu0 0.0
    %63 = vmatpush.msra.mxu0 0.0
    %64 = vmatpush.msra.mxu0 %v34
    %65 = vmatpush.msra.mxu0 %v33
    %66 = vmatpush.msra.mxu0 %v32
    %67 = vmatpush.msra.mxu0 %v31
    %68 = vmatmul.f32.gmra.mxu0 %v41
    %v69 = vpop.f32.mrf.mxu0
    %v70 = vadd.f32 %v37, %v69
    %71 = vmatmul.f32.gmra.mxu0 %v44
    %v72 = vpop.f32.mrf.mxu0
    %v73 = vadd.f32 %v37, %v72
    %74 = vmatmul.f32.gmra.mxu0 %v47
    %v75 = vpop.f32.mrf.mxu0
    %v76 = vadd.f32 %v37, %v75
    %77 = vmatmul.f32.gmra.mxu0 %v50
    %v78 = vpop.f32.mrf.mxu0
    %v79 = vadd.f32 %v37, %v78
    %80 = vdwg.mxu0
    %v81 = vmul.f32 %v70, 0.5
    %v82 = vmul.f32 %v73, 0.5
    %v83 = vmul.f32 %v76, 0.5
    %v84 = vmul.f32 %v79, 0.5
    %v85 = vmul.f32 %v70, 0.70710677
    %v86 = vmul.f32 %v73, 0.70710677
    %v87 = vmul.f32 %v76, 0.70710677
    %v88 = vmul.f32 %v79, 0.70710677
    %v89 = vmul.f32 %v85, %v85
    %v90 = vmin.f32 16.0, %v89
    %v91 = vmul.f32 %v90, 2.1237322e-06
    %v92 = vadd.f32 %v91, 0.00028619796
    %v93 = vmul.f32 %v90, %v92
    %v94 = vadd.f32 %v93, 0.0036580483
    %v95 = vmul.f32 %v90, %v94
    %v96 = vadd.f32 %v95, 0.05243302
    %v97 = vmul.f32 %v90, %v96
    %v98 = vadd.f32 %v97, 0.18741608
    %v99 = vmul.f32 %v90, %v98
    %v100 = vadd.f32 %v99, 1.1283791
    %v101 = vmul.f32 %v85, %v100
    %v102 = vmul.f32 %v90, 3.8918573e-05
    %v103 = vadd.f32 %v102, 0.001143296
    %v104 = vmul.f32 %v90, %v103
    %v105 = vadd.f32 %v104, 0.014752088
    %v106 = vmul.f32 %v90, %v105
    %v107 = vadd.f32 %v106, 0.112945676
    %v108 = vmul.f32 %v90, %v107
    %v109 = vadd.f32 %v108, 0.4994258
    %v110 = vmul.f32 %v90, %v109
    %v111 = vadd.f32 %v110, 1.0
    %v112 = vrcp.pop %v111
    %v113 = vmul.f32 %v111, %v112
    %v114 = vsub.f32 1.0, %v113
    %v115 = vmul.f32 %v112, %v114
    %v116 = vadd.f32 %v112, %v115
    %vm117 = vweird.f32 %v111
    %vm118 = vweird.f32 %v112
    %vm119 = vmor %vm117, %vm118
    %v120 = vsel %vm119, %v112, %v116
    %v121 = vand.u32 2147483647, %v111
    %vm122 = vcmp.eq.f32.partialorder %v121, 8.507059e+37
    %v123 = vand.u32 %v111, 2147483648
    %v124 = vor.u32 1.1754944e-38, %v123
    %v125 = vsel %vm122, %v124, %v120
    %v126 = vmul.f32 %v101, %v125
    %v127 = vmin.f32 %v126, 1.0
    %v128 = vmax.f32 %v127, -1.0
    %v129 = vmul.f32 %v86, %v86
    %v130 = vmin.f32 16.0, %v129
    %v131 = vmul.f32 %v130, 2.1237322e-06
    %v132 = vadd.f32 %v131, 0.00028619796
    %v133 = vmul.f32 %v130, %v132
    %v134 = vadd.f32 %v133, 0.0036580483
    %v135 = vmul.f32 %v130, %v134
    %v136 = vadd.f32 %v135, 0.05243302
    %v137 = vmul.f32 %v130, %v136
    %v138 = vadd.f32 %v137, 0.18741608
    %v139 = vmul.f32 %v130, %v138
    %v140 = vadd.f32 %v139, 1.1283791
    %v141 = vmul.f32 %v86, %v140
    %v142 = vmul.f32 %v130, 3.8918573e-05
    %v143 = vadd.f32 %v142, 0.001143296
    %v144 = vmul.f32 %v130, %v143
    %v145 = vadd.f32 %v144, 0.014752088
    %v146 = vmul.f32 %v130, %v145
    %v147 = vadd.f32 %v146, 0.112945676
    %v148 = vmul.f32 %v130, %v147
    %v149 = vadd.f32 %v148, 0.4994258
    %v150 = vmul.f32 %v130, %v149
    %v151 = vadd.f32 %v150, 1.0
    %v152 = vrcp.pop %v151
    %v153 = vmul.f32 %v151, %v152
    %v154 = vsub.f32 1.0, %v153
    %v155 = vmul.f32 %v152, %v154
    %v156 = vadd.f32 %v152, %v155
    %vm157 = vweird.f32 %v151
    %vm158 = vweird.f32 %v152
    %vm159 = vmor %vm157, %vm158
    %v160 = vsel %vm159, %v152, %v156
    %v161 = vand.u32 2147483647, %v151
    %vm162 = vcmp.eq.f32.partialorder %v161, 8.507059e+37
    %v163 = vand.u32 %v151, 2147483648
    %v164 = vor.u32 1.1754944e-38, %v163
    %v165 = vsel %vm162, %v164, %v160
    %v166 = vmul.f32 %v141, %v165
    %v167 = vmin.f32 %v166, 1.0
    %v168 = vmax.f32 %v167, -1.0
    %v169 = vmul.f32 %v87, %v87
    %v170 = vmin.f32 16.0, %v169
    %v171 = vmul.f32 %v170, 2.1237322e-06
    %v172 = vadd.f32 %v171, 0.00028619796
    %v173 = vmul.f32 %v170, %v172
    %v174 = vadd.f32 %v173, 0.0036580483
    %v175 = vmul.f32 %v170, %v174
    %v176 = vadd.f32 %v175, 0.05243302
    %v177 = vmul.f32 %v170, %v176
    %v178 = vadd.f32 %v177, 0.18741608
    %v179 = vmul.f32 %v170, %v178
    %v180 = vadd.f32 %v179, 1.1283791
    %v181 = vmul.f32 %v87, %v180
    %v182 = vmul.f32 %v170, 3.8918573e-05
    %v183 = vadd.f32 %v182, 0.001143296
    %v184 = vmul.f32 %v170, %v183
    %v185 = vadd.f32 %v184, 0.014752088
    %v186 = vmul.f32 %v170, %v185
    %v187 = vadd.f32 %v186, 0.112945676
    %v188 = vmul.f32 %v170, %v187
    %v189 = vadd.f32 %v188, 0.4994258
    %v190 = vmul.f32 %v170, %v189
    %v191 = vadd.f32 %v190, 1.0
    %v192 = vrcp.pop %v191
    %v193 = vmul.f32 %v191, %v192
    %v194 = vsub.f32 1.0, %v193
    %v195 = vmul.f32 %v192, %v194
    %v196 = vadd.f32 %v192, %v195
    %vm197 = vweird.f32 %v191
    %vm198 = vweird.f32 %v192
    %vm199 = vmor %vm197, %vm198
    %v200 = vsel %vm199, %v192, %v196
    %v201 = vand.u32 2147483647, %v191
    %vm202 = vcmp.eq.f32.partialorder %v201, 8.507059e+37
    %v203 = vand.u32 %v191, 2147483648
    %v204 = vor.u32 1.1754944e-38, %v203
    %v205 = vsel %vm202, %v204, %v200
    %v206 = vmul.f32 %v181, %v205
    %v207 = vmin.f32 %v206, 1.0
    %v208 = vmax.f32 %v207, -1.0
    %v209 = vmul.f32 %v88, %v88
    %v210 = vmin.f32 16.0, %v209
    %v211 = vmul.f32 %v210, 2.1237322e-06
    %v212 = vadd.f32 %v211, 0.00028619796
    %v213 = vmul.f32 %v210, %v212
    %v214 = vadd.f32 %v213, 0.0036580483
    %v215 = vmul.f32 %v210, %v214
    %v216 = vadd.f32 %v215, 0.05243302
    %v217 = vmul.f32 %v210, %v216
    %v218 = vadd.f32 %v217, 0.18741608
    %v219 = vmul.f32 %v210, %v218
    %v220 = vadd.f32 %v219, 1.1283791
    %v221 = vmul.f32 %v88, %v220
    %v222 = vmul.f32 %v210, 3.8918573e-05
    %v223 = vadd.f32 %v222, 0.001143296
    %v224 = vmul.f32 %v210, %v223
    %v225 = vadd.f32 %v224, 0.014752088
    %v226 = vmul.f32 %v210, %v225
    %v227 = vadd.f32 %v226, 0.112945676
    %v228 = vmul.f32 %v210, %v227
    %v229 = vadd.f32 %v228, 0.4994258
    %v230 = vmul.f32 %v210, %v229
    %v231 = vadd.f32 %v230, 1.0
    %v232 = vrcp.pop %v231
    %v233 = vmul.f32 %v231, %v232
    %v234 = vsub.f32 1.0, %v233
    %v235 = vmul.f32 %v232, %v234
    %v236 = vadd.f32 %v232, %v235
    %vm237 = vweird.f32 %v231
    %vm238 = vweird.f32 %v232
    %vm239 = vmor %vm237, %vm238
    %v240 = vsel %vm239, %v232, %v236
    %v241 = vand.u32 2147483647, %v231
    %vm242 = vcmp.eq.f32.partialorder %v241, 8.507059e+37
    %v243 = vand.u32 %v231, 2147483648
    %v244 = vor.u32 1.1754944e-38, %v243
    %v245 = vsel %vm242, %v244, %v240
    %v246 = vmul.f32 %v221, %v245
    %v247 = vmin.f32 %v246, 1.0
    %v248 = vmax.f32 %v247, -1.0
    %v249 = vadd.f32 %v128, 1.0
    %v250 = vadd.f32 %v168, 1.0
    %v251 = vadd.f32 %v208, 1.0
    %v252 = vadd.f32 %v248, 1.0
    %v253 = vmul.f32 %v81, %v249
    %v254 = vmul.f32 %v82, %v250
    %v255 = vmul.f32 %v83, %v251
    %v256 = vmul.f32 %v84, %v252
    %v257 = vld [vmem:[%s3] sm:$0xff]
    %v258 = vld [vmem:[%s3 + $0x8] sm:$0xff]
    %v259 = vld [vmem:[%s3 + $0x10] sm:$0xff]
    %v260 = vld [vmem:[%s3 + $0x18] sm:$0xff]
    %v261 = vmul.f32 %v253, %v257
    %v262 = vmul.f32 %v254, %v258
    %v263 = vmul.f32 %v255, %v259
    %v264 = vmul.f32 %v256, %v260
    %v265 = vld [vmem:[%s4] sm:$0xff]
    %v266 = vld [vmem:[%s4 + $0x8] sm:$0xff]
    %v267 = vld [vmem:[%s4 + $0x10] sm:$0xff]
    %v268 = vld [vmem:[%s4 + $0x18] sm:$0xff]
    %v269 = vld [vmem:[%s4 + $0x20] sm:$0xff]
    %v270 = vld [vmem:[%s4 + $0x28] sm:$0xff]
    %vm271 = vcmask 392192
    %v273 = vsel %vm271, %v261, 0
    %v276 = vsel %vm271, %v262, 0
    %v279 = vsel %vm271, %v263, 0
    %v282 = vsel %vm271, %v264, 0
    %284 = vmatpush.msra.mxu0 0.0
    %285 = vmatpush.msra.mxu0 0.0
    %286 = vmatpush.msra.mxu0 0.0
    %287 = vmatpush.msra.mxu0 0.0
    %288 = vmatpush.msra.mxu0 0.0
    %289 = vmatpush.msra.mxu0 0.0
    %290 = vmatpush.msra.mxu0 0.0
    %291 = vmatpush.msra.mxu0 0.0
    %292 = vmatpush.msra.mxu0 0.0
    %293 = vmatpush.msra.mxu0 0.0
    %294 = vmatpush.msra.mxu0 %v270
    %295 = vmatpush.msra.mxu0 %v269
    %296 = vmatpush.msra.mxu0 %v268
    %297 = vmatpush.msra.mxu0 %v267
    %298 = vmatpush.msra.mxu0 %v266
    %299 = vmatpush.msra.mxu0 %v265
    %300 = vmatmul.f32.gmra.mxu0 %v273
    %v301 = vpop.f32.mrf.mxu0
    %v302 = vadd.f32 0.0, %v301
    %303 = vmatmul.f32.gmra.mxu0 %v276
    %v304 = vpop.f32.mrf.mxu0
    %v305 = vadd.f32 0.0, %v304
    %306 = vmatmul.f32.gmra.mxu0 %v279
    %v307 = vpop.f32.mrf.mxu0
    %v308 = vadd.f32 0.0, %v307
    %309 = vmatmul.f32.gmra.mxu0 %v282
    %v310 = vpop.f32.mrf.mxu0
    %v311 = vadd.f32 0.0, %v310
    %312 = vdwg.mxu0
    %v313 = vld [vmem:[%s5] sm:$0x3]
    %v314 = vld [vmem:[%s6] sm:$0x1]
    %v316 = vperm.slane %v314, 0
    %v319 = vsel %vm39, %v313, 0
    %321 = vmatpush.msra.mxu0 0.0
    %322 = vmatpush.msra.mxu0 0.0
    %323 = vmatpush.msra.mxu0 0.0
    %324 = vmatpush.msra.mxu0 0.0
    %325 = vmatpush.msra.mxu0 0.0
    %326 = vmatpush.msra.mxu0 0.0
    %327 = vmatpush.msra.mxu0 0.0
    %328 = vmatpush.msra.mxu0 0.0
    %329 = vmatpush.msra.mxu0 0.0
    %330 = vmatpush.msra.mxu0 0.0
    %331 = vmatpush.msra.mxu0 0.0
    %332 = vmatpush.msra.mxu0 0.0
    %333 = vmatpush.msra.mxu0 %v311
    %334 = vmatpush.msra.mxu0 %v308
    %335 = vmatpush.msra.mxu0 %v305
    %336 = vmatpush.msra.mxu0 %v302
    %337 = vmatmul.f32.gmra.mxu0 %v319
    %v338 = vpop.f32.mrf.mxu0
    %v339 = vadd.f32 %v316, %v338
    %340 = vdwg.mxu0
    %vm341 = vcmask 17408
    %342 = vst.msk [vmem:[#allocation2] sm:$0x3] %vm341, %v339
    // Predicated region
    $region30: #{predict_forward.1} parent=1 // pred_check
      _
    $region31: #{predict_forward.1} parent=1 // pred_check_branch
      %344 = sbr.rel (0) target = $region33
    $region32: #{predict_forward.1} parent=1 // pred_region
      %346 = vsyncadd [#allocation3], 0
      %s348 = sshll.u32 [#allocation2], 4
      %s349 = int_to_ptr.vmem [resolvable:$true] %s348
      %s350 = sshll.u32 %s7, 4
      %s351 = int_to_ptr.hbm [resolvable:$true] %s350
      %353 = dma.vmem_to_hbm [thread:$0]  %s349, 32, %s351, [#allocation3]
    $region33: #{predict_forward.1} parent=1 // pred_fallthru
      _
    // Predicated region
    $region34: #{predict_forward.1} parent=1 // pred_check
      _
    $region35: #{predict_forward.1} parent=1 // pred_check_branch
      %355 = sbr.rel (0) target = $region37
    $region36: #{predict_forward.1} parent=1 // pred_region
      %357 = dma.done [#allocation3], 32
    $region37: #{predict_forward.1} parent=1 // pred_fallthru
      _
    %358 = vsyncpa [#allocation3], 1

</llo_original>
